<compile_context>
chip_gen: v6e
topology: v6e:2x2x1
jax: 0.10.0
libtpu: 0.0.40
codegen_flags: <defaults>
</compile_context>

<pallas_src>
import jax
import jax.numpy as jnp
from jax.experimental import pallas as pl
from jax.experimental.pallas import tpu as pltpu


# --------------------------------- helpers ----------------------------------

def _round_up(x, m):
    return ((x + m - 1) // m) * m


def _vmem_budget_bytes():
    """Per-generation scoped-VMEM budget: half of physical, capped at 64 MiB."""
    cap = 64 << 20                                    # conservative default (v7x)
    try:
        cap = int(pltpu.get_tpu_info().vmem_capacity_bytes)
    except Exception:
        pass
    return int(min(max(cap // 2, 16 << 20), 64 << 20))


# --------------------------- fused single-pass path --------------------------

def _make_fused_kernel(s_true):
    inv_s = 1.0 / float(s_true)

    def kernel(w1t_ref, w2_ref, x_ref, o_ref):
        # x_ref / o_ref: (tB, C, S); w1t_ref / w2_ref: (C, Cr) f32.
        x = x_ref[...]
        # Squeeze: spatial mean with f32 accumulation.               (tB, C, 1)
        z = jnp.sum(x.astype(jnp.float32), axis=-1, keepdims=True) * inv_s
        # Excitation MLP as broadcast-multiply + reduce (no tiny matvecs).
        h = jnp.sum(w1t_ref[...] * z, axis=1, keepdims=True)         # (tB, 1, Cr)
        h = jnp.maximum(h, 0.0)
        g = jnp.sum(w2_ref[...] * h, axis=-1, keepdims=True)         # (tB, C, 1)
        g = 1.0 / (1.0 + jnp.exp(-g))                                 # sigmoid
        # Scale: f32 multiply, cast back to the input dtype.
        o_ref[...] = (x * g).astype(o_ref.dtype)

    return kernel


# ----------------------------- two-pass fallback -----------------------------

def _make_reduce_kernel(s_true, t_s, n_s_per, needs_mask):
    def kernel(x_ref, sum_ref):
        # x_ref: (1, C, tS); sum_ref: (1, 1, C, 1) f32, resident across axis 2.
        s_idx = pl.program_id(2)

        @pl.when(s_idx == 0)
        def _():
            sum_ref[...] = jnp.zeros_like(sum_ref)

        x = x_ref[0].astype(jnp.float32)                              # (C, tS)
        if needs_mask:
            start = (pl.program_id(1) * n_s_per + s_idx) * t_s
            col = jax.lax.broadcasted_iota(jnp.int32, x.shape, 1)
            x = jnp.where(col < (s_true - start), x, 0.0)
        sum_ref[0, 0] += jnp.sum(x, axis=-1, keepdims=True)

    return kernel


def _scale_kernel(g_ref, x_ref, o_ref):
    # g_ref: (1, C, 1) f32; x_ref / o_ref: (1, C, tS).
    o_ref[...] = (x_ref[...] * g_ref[...]).astype(o_ref.dtype)


# --------------------------------- wrapper -----------------------------------

def se_block_3d(x, w1, w2, *, donate_input=False, force_two_pass=False,
                max_lanes=None, max_batch_block=None):
    """SEBlock3D forward.

    x: (B, C, H, W, D); w1: (C//4, C); w2: (C, C//4)  (PyTorch Linear layout,
    bias=False).  The keyword args are tuning / test overrides only.
    """
    B, C, H, W, D = x.shape
    Cr = w1.shape[0]
    S = H * W * D
    x_flat = x.reshape(B, C, S)                       # metadata-only reshape

    itemsize = jnp.dtype(x.dtype).itemsize
    budget = _vmem_budget_bytes()
    usable = budget - (4 << 20)                       # headroom for the compiler

    w1t = w1.T.astype(jnp.float32)                    # (C, Cr)
    w2f = w2.astype(jnp.float32)                      # (C, Cr)

    # ------------------ fused single-pass path (preferred) ------------------
    # Per batch row: in + out double-buffered (+ f32 temporaries) + MLP temps.
    slab_cost = C * S * (4 * itemsize + 4) + 48 * C * Cr
    w_cost = 32 * C * Cr                              # both f32 weights, x2 buffers
    fits_fused = (not force_two_pass) and slab_cost <= max(usable - w_cost, 0)

    if fits_fused:
        t_b = max(1, min(B, (usable - w_cost) // slab_cost))
        if max_batch_block is not None:
            t_b = max(1, min(t_b, int(max_batch_block)))
        out_flat = pl.pallas_call(
            _make_fused_kernel(S),
            out_shape=jax.ShapeDtypeStruct((B, C, S), x.dtype),
            grid_spec=pltpu.PrefetchScalarGridSpec(
                num_scalar_prefetch=0,
                grid=(pl.cdiv(B, t_b),),
                in_specs=[
                    pl.BlockSpec((C, Cr), lambda i: (0, 0)),
                    pl.BlockSpec((C, Cr), lambda i: (0, 0)),
                    pl.BlockSpec((t_b, C, S), lambda i: (i, 0, 0)),
                ],
                out_specs=pl.BlockSpec((t_b, C, S), lambda i: (i, 0, 0)),
            ),
            compiler_params=pltpu.CompilerParams(
                dimension_semantics=("parallel",),
                vmem_limit_bytes=budget),
            input_output_aliases=({2: 0} if donate_input else {}),
        )(w1t, w2f, x_flat)
        return out_flat.reshape(B, C, H, W, D)

    # --------------------------- two-pass fallback ---------------------------
    # Lane-tile sizing: target multi-MB, >=512-lane blocks within the budget.
    per_col = C * (4 * itemsize + 4)                  # pass-2 working set / lane column
    t_s_cap = max((usable // per_col) // 128 * 128, 128)
    t_s_want = max(512, _round_up(pl.cdiv(2 << 20, C * itemsize), 128))
    t_s = max(128, min(t_s_cap, t_s_want, _round_up(S, 128)))
    if max_lanes is not None:
        t_s = max(128, min(t_s, int(max_lanes) // 128 * 128))

    n_s = pl.cdiv(S, t_s)
    p_split = 2 if n_s >= 2 else 1                    # keep both v7x TCs busy at small B
    n_s_per = pl.cdiv(n_s, p_split)
    overhang = p_split * n_s_per != n_s
    needs_mask = (S % t_s != 0) or overhang

    def x_reduce_map(b, p, s):
        blk = p * n_s_per + s
        if overhang:
            blk = jnp.minimum(blk, n_s - 1)           # keep DMA in bounds; mask zeroes it
        return (b, 0, blk)

    # Pass 1: tiled, masked spatial sum -> per-(batch, split) partials, f32.
    partials = pl.pallas_call(
        _make_reduce_kernel(S, t_s, n_s_per, needs_mask),
        out_shape=jax.ShapeDtypeStruct((B, p_split, C, 1), jnp.float32),
        grid_spec=pltpu.PrefetchScalarGridSpec(
            num_scalar_prefetch=0,
            grid=(B, p_split, n_s_per),
            in_specs=[pl.BlockSpec((1, C, t_s), x_reduce_map)],
            out_specs=pl.BlockSpec((1, 1, C, 1), lambda b, p, s: (b, p, 0, 0)),
        ),
        compiler_params=pltpu.CompilerParams(
            dimension_semantics=("parallel", "parallel", "arbitrary"),
            vmem_limit_bytes=budget),
    )(x_flat)

    # Tiny excitation MLP on the (B, C) means: plain XLA, f32.
    z = partials[:, :, :, 0].sum(axis=1) * (1.0 / S)                  # (B, C)
    h = jnp.maximum(z @ w1t, 0.0)                                     # (B, Cr)
    gate = jax.nn.sigmoid(h @ w2f.T)                                  # (B, C) f32
    gate = gate[:, :, None]                                           # (B, C, 1)

    # Pass 2: tiled broadcast scale (boundary blocks handled by clipped writes).
    out_flat = pl.pallas_call(
        _scale_kernel,
        out_shape=jax.ShapeDtypeStruct((B, C, S), x.dtype),
        grid_spec=pltpu.PrefetchScalarGridSpec(
            num_scalar_prefetch=0,
            grid=(B, n_s),
            in_specs=[
                pl.BlockSpec((1, C, 1), lambda b, s: (b, 0, 0)),
                pl.BlockSpec((1, C, t_s), lambda b, s: (b, 0, s)),
            ],
            out_specs=pl.BlockSpec((1, C, t_s), lambda b, s: (b, 0, s)),
        ),
        compiler_params=pltpu.CompilerParams(
            dimension_semantics=("parallel", "parallel"),
            vmem_limit_bytes=budget),
        input_output_aliases=({1: 0} if donate_input else {}),
    )(gate, x_flat)
    return out_flat.reshape(B, C, H, W, D)


# -------------------------------- reference ----------------------------------

def reference(x, w1, w2):
    z = jnp.mean(x, axis=(2, 3, 4))                   # (B, C)
    h = jnp.maximum(z @ w1.T, 0.0)                    # (B, C//4)
    s = jax.nn.sigmoid(h @ w2.T)                      # (B, C)
    return x * s[:, :, None, None, None]


if __name__ == "__main__":
    key = jax.random.PRNGKey(0)

    cases = [
        ((2, 8, 8, 8, 4), {}),                                           # fused path
        ((3, 8, 8, 8, 4), dict(max_batch_block=2)),                      # fused, partial batch block
        ((2, 8, 8, 8, 4), dict(force_two_pass=True, max_lanes=128)),     # 2-pass, megacore split
        ((1, 8, 6, 5, 6), dict(force_two_pass=True, max_lanes=128)),     # 2-pass, ragged tail mask
        ((1, 8, 8, 6, 8), dict(force_two_pass=True, max_lanes=128)),     # 2-pass, odd-nS overhang
    ]

    for idx, (shape, kw) in enumerate(cases):
        B, C, H, W, D = shape
        Cr = C // 4
        kx, k1, k2 = jax.random.split(jax.random.fold_in(key, idx), 3)
        x = jax.random.normal(kx, shape, dtype=jnp.float32)
        # PyTorch Linear layout: (out_features, in_features), bias=False.
        w1 = jax.random.normal(k1, (Cr, C), dtype=jnp.float32) * (1.0 / jnp.sqrt(C))
        w2 = jax.random.normal(k2, (C, Cr), dtype=jnp.float32) * (1.0 / jnp.sqrt(Cr))

        out = jax.block_until_ready(se_block_3d(x, w1, w2, **kw))
        ref = reference(x, w1, w2)
        assert out.shape == x.shape
        assert jnp.allclose(out, ref, atol=1e-5, rtol=1e-5), \
            f"mismatch vs reference for case {idx}: shape={shape} kwargs={kw}"

    print("KERNEL_OK")
</pallas_src>

<mosaic_0001>
module attributes {stable_mosaic.version = 11 : i64} {
  func.func @kernel(%arg0: i32, %arg1: memref<8x2xf32, #tpu.memory_space<vmem>>, %arg2: memref<8x2xf32, #tpu.memory_space<vmem>>, %arg3: memref<2x8x256xf32, #tpu.memory_space<vmem>>, %arg4: memref<2x8x256xf32, #tpu.memory_space<vmem>>) attributes {dimension_semantics = [#tpu.dimension_semantics<parallel>], iteration_bounds = array<i64: 1>, scalar_prefetch = 0 : i64, scratch_operands = 0 : i64, tpu.core_type = #tpu.core_type<tc>, window_params = [{pipeline_mode = #tpu.pipeline_mode<synchronous>, transform_indices = @transform_0, window_bounds = array<i64: 8, 2>}, {pipeline_mode = #tpu.pipeline_mode<synchronous>, transform_indices = @transform_1, window_bounds = array<i64: 8, 2>}, {transform_indices = @transform_2, window_bounds = array<i64: 2, 8, 256>}, {transform_indices = @transform_3, window_bounds = array<i64: 2, 8, 256>}]} {
    %c0 = arith.constant 0 : index
    %c0_0 = arith.constant 0 : index
    %c0_1 = arith.constant 0 : index
    %0 = vector.load %arg3[%c0, %c0_0, %c0_1] : memref<2x8x256xf32, #tpu.memory_space<vmem>>, vector<2x8x256xf32>
    %cst = arith.constant dense<0.000000e+00> : vector<2x8xf32>
    %1 = vector.multi_reduction <add>, %0, %cst [2] : vector<2x8x256xf32> to vector<2x8xf32>
    %2 = vector.shape_cast %1 : vector<2x8xf32> to vector<2x8x1xf32>
    %cst_2 = arith.constant 3.906250e-03 : f32
    %3 = vector.broadcast %cst_2 : f32 to vector<2x8x1xf32>
    %4 = arith.mulf %2, %3 : vector<2x8x1xf32>
    %c0_3 = arith.constant 0 : index
    %c0_4 = arith.constant 0 : index
    %5 = vector.load %arg1[%c0_3, %c0_4] : memref<8x2xf32, #tpu.memory_space<vmem>>, vector<8x2xf32>
    %6 = vector.shape_cast %5 : vector<8x2xf32> to vector<1x8x2xf32>
    %7 = vector.broadcast %6 : vector<1x8x2xf32> to vector<2x8x2xf32>
    %8 = vector.broadcast %4 : vector<2x8x1xf32> to vector<2x8x2xf32>
    %9 = arith.mulf %7, %8 : vector<2x8x2xf32>
    %cst_5 = arith.constant dense<0.000000e+00> : vector<2x2xf32>
    %10 = vector.multi_reduction <add>, %9, %cst_5 [1] : vector<2x8x2xf32> to vector<2x2xf32>
    %11 = vector.shape_cast %10 : vector<2x2xf32> to vector<2x1x2xf32>
    %cst_6 = arith.constant 0.000000e+00 : f32
    %12 = vector.broadcast %cst_6 : f32 to vector<2x1x2xf32>
    %13 = arith.maximumf %11, %12 : vector<2x1x2xf32>
    %c0_7 = arith.constant 0 : index
    %c0_8 = arith.constant 0 : index
    %14 = vector.load %arg2[%c0_7, %c0_8] : memref<8x2xf32, #tpu.memory_space<vmem>>, vector<8x2xf32>
    %15 = vector.shape_cast %14 : vector<8x2xf32> to vector<1x8x2xf32>
    %16 = vector.broadcast %15 : vector<1x8x2xf32> to vector<2x8x2xf32>
    %17 = vector.broadcast %13 : vector<2x1x2xf32> to vector<2x8x2xf32>
    %18 = arith.mulf %16, %17 : vector<2x8x2xf32>
    %cst_9 = arith.constant dense<0.000000e+00> : vector<2x8xf32>
    %19 = vector.multi_reduction <add>, %18, %cst_9 [2] : vector<2x8x2xf32> to vector<2x8xf32>
    %20 = vector.shape_cast %19 : vector<2x8xf32> to vector<2x8x1xf32>
    %cst_10 = arith.constant 0.000000e+00 : f32
    %21 = vector.broadcast %cst_10 : f32 to vector<2x8x1xf32>
    %22 = arith.subf %21, %20 : vector<2x8x1xf32>
    %23 = math.exp %22 : vector<2x8x1xf32>
    %cst_11 = arith.constant 1.000000e+00 : f32
    %24 = vector.broadcast %cst_11 : f32 to vector<2x8x1xf32>
    %25 = arith.addf %24, %23 : vector<2x8x1xf32>
    %cst_12 = arith.constant 1.000000e+00 : f32
    %26 = vector.broadcast %cst_12 : f32 to vector<2x8x1xf32>
    %27 = arith.divf %26, %25 : vector<2x8x1xf32>
    %28 = vector.broadcast %27 : vector<2x8x1xf32> to vector<2x8x256xf32>
    %29 = arith.mulf %0, %28 : vector<2x8x256xf32>
    %c0_13 = arith.constant 0 : index
    %c0_14 = arith.constant 0 : index
    %c0_15 = arith.constant 0 : index
    %30 = vector.load %arg4[%c0_13, %c0_14, %c0_15] : memref<2x8x256xf32, #tpu.memory_space<vmem>>, vector<2x8x256xf32>
    tpu.vector_store %arg4[%c0_13, %c0_14, %c0_15], %29 {strides = array<i32>} : memref<2x8x256xf32, #tpu.memory_space<vmem>>, vector<2x8x256xf32>,
    return
  }
  func.func @transform_0(%arg0: i32) -> (i32, i32) {
    %c0_i32 = arith.constant 0 : i32
    %c0_i32_0 = arith.constant 0 : i32
    %c0_i32_1 = arith.constant 0 : i32
    return %c0_i32, %c0_i32_0 : i32, i32
  }
  func.func @transform_1(%arg0: i32) -> (i32, i32) {
    %c0_i32 = arith.constant 0 : i32
    %c0_i32_0 = arith.constant 0 : i32
    %c0_i32_1 = arith.constant 0 : i32
    return %c0_i32, %c0_i32_0 : i32, i32
  }
  func.func @transform_2(%arg0: i32) -> (i32, i32, i32) {
    %c0_i32 = arith.constant 0 : i32
    %c0_i32_0 = arith.constant 0 : i32
    %c0_i32_1 = arith.constant 0 : i32
    return %arg0, %c0_i32, %c0_i32_0 : i32, i32, i32
  }
  func.func @transform_3(%arg0: i32) -> (i32, i32, i32) {
    %c0_i32 = arith.constant 0 : i32
    %c0_i32_0 = arith.constant 0 : i32
    %c0_i32_1 = arith.constant 0 : i32
    return %arg0, %c0_i32, %c0_i32_0 : i32, i32, i32
  }
}

</mosaic_0001>

<llo_original>
// kernel: tpu_custom_call.1
$region0: #{tpu_custom_call.1}
  #allocation0 [shape = 'u32[]', space=smem, size = 0x4, offset = 0x4, fixed_abs, tag = 'smem constant byte address 0x4 - core index']
  #allocation1 [shape = 'u32[144,128]{1,0:T(1,128)}', space=vmem, size = 0x12000, scoped, tag = 'internal scratch']
  %s0 = inlined_call_operand.vmem [shape: f32[8,2], index: 0, kind: input, shape index: {}]
  %s1 = inlined_call_operand.vmem [shape: f32[8,2], index: 1, kind: input, shape index: {}]
  %s2 = inlined_call_operand.hbm [shape: f32[2,8,256], index: 2, kind: input, shape index: {}]
  %s3 = inlined_call_operand.hbm [shape: f32[2,8,256], index: 3, kind: output, shape index: {}]
  %s4 = sld [smem:[#allocation0]]
  $region26: #{tpu_custom_call.1} parent=0
    _
  %s6 = ssub.s32 1, %s4
  %s7 = scalar_select 0, %s6, %s4
  $region1: #{tpu_custom_call.1} parent=0
    #allocation2 [shape = 'u8[16384]{0}', space=vmem, size = 0x4000, scoped, tag = 'input window, operand 2, single buffered']
    #allocation3 [shape = 's32[1]{0}', space=sflag, size = 0x4, scoped, tag = 'scoped memory for tpu_custom_call.1']
    #allocation4 [shape = 's32[1]{0}', space=sflag, size = 0x4, scoped, tag = 'scoped memory for tpu_custom_call.1']
    #allocation5 [shape = 'u8[16384]{0}', space=vmem, size = 0x4000, scoped, tag = 'output window, operand 0, single buffered']
    %8 = vsyncpa [#allocation3], 0
    %9 = vsyncpa [#allocation4], 0
    // Predicated region
    $region2: #{tpu_custom_call.1} parent=1 // pred_check
      _
    $region3: #{tpu_custom_call.1} parent=1 // pred_check_branch
      %11 = sbr.rel (0) target = $region5
    $region4: #{tpu_custom_call.1} parent=1 // pred_region
      _
    $region5: #{tpu_custom_call.1} parent=1 // pred_fallthru
      _
    // Predicated region
    $region6: #{tpu_custom_call.1} parent=1 // pred_check
      _
    $region7: #{tpu_custom_call.1} parent=1 // pred_check_branch
      %13 = sbr.rel (0) target = $region9
    $region8: #{tpu_custom_call.1} parent=1 // pred_region
      _
    $region9: #{tpu_custom_call.1} parent=1 // pred_fallthru
      _
    // Predicated region
    $region10: #{tpu_custom_call.1} parent=1 // pred_check
      _
    $region11: #{tpu_custom_call.1} parent=1 // pred_check_branch
      %15 = sbr.rel (0) target = $region13
    $region12: #{tpu_custom_call.1} parent=1 // pred_region
      %s17 = ssub.s32 512, 512
      %18 = vsyncadd [#allocation3], %s17
      %s19 = sshll.u32 [#allocation2], 4
      %s20 = int_to_ptr.vmem [resolvable:$true] %s19
      %25 = dma.hbm_to_vmem [thread:$0]  %s2, 512, %s20, [#allocation3], 256, 256, 16
    $region13: #{tpu_custom_call.1} parent=1 // pred_fallthru
      _
    // Predicated region
    $region14: #{tpu_custom_call.1} parent=1 // pred_check
      _
    $region15: #{tpu_custom_call.1} parent=1 // pred_check_branch
      %27 = sbr.rel (0) target = $region17
    $region16: #{tpu_custom_call.1} parent=1 // pred_region
      %28 = dma.done [#allocation3], 512
    $region17: #{tpu_custom_call.1} parent=1 // pred_fallthru
      _
    %v29 = vld [vmem:[#allocation2] sm:$0xff]
    %v30 = vld [vmem:[#allocation2 + $0x8] sm:$0xff]
    %v31 = vld [vmem:[#allocation2 + $0x10] sm:$0xff]
    %v32 = vld [vmem:[#allocation2 + $0x18] sm:$0xff]
    %v33 = vadd.f32 %v29, %v30
    %34 = vadd.xlane.f32.xlu0 %v33
    %v35 = vpop.xlane.xlu0 %34
    %v36 = vadd.f32 %v31, %v32
    %37 = vadd.xlane.f32.xlu0 %v36
    %v38 = vpop.xlane.xlu0 %37
    %v39 = vmul.f32 %v35, 0.00390625
    %v40 = vmul.f32 %v38, 0.00390625
    %v41 = vld [vmem:[%s0] sm:$0xff]
    %v42 = vmul.f32 %v41, %v39
    %v43 = vmul.f32 %v41, %v40
    %vm44 = vcmask 15360
    %v45 = vsel %vm44, %v42, 0.0
    %v46 = vrot.slane %v45, 4
    %v47 = vadd.f32 %v45, %v46
    %v48 = vrot.slane %v47, 2
    %v49 = vadd.f32 %v47, %v48
    %v50 = vrot.slane %v49, 1
    %v51 = vadd.f32 %v49, %v50
    %v52 = vsel %vm44, %v43, 0.0
    %v53 = vrot.slane %v52, 4
    %v54 = vadd.f32 %v52, %v53
    %v55 = vrot.slane %v54, 2
    %v56 = vadd.f32 %v54, %v55
    %v57 = vrot.slane %v56, 1
    %v58 = vadd.f32 %v56, %v57
    %v59 = vmax.f32 %v51, 0.0
    %v60 = vmax.f32 %v58, 0.0
    %v61 = vld [vmem:[%s1] sm:$0xff]
    %v62 = vmul.f32 %v61, %v59
    %v63 = vmul.f32 %v61, %v60
    %v64 = vsel %vm44, %v62, 0.0
    %65 = vadd.xlane.f32.xlu0 %v64
    %v66 = vpop.xlane.xlu0 %65
    %v67 = vsel %vm44, %v63, 0.0
    %68 = vadd.xlane.f32.xlu0 %v67
    %v69 = vpop.xlane.xlu0 %68
    %v70 = vsub.f32 0.0, %v66
    %v71 = vsub.f32 0.0, %v69
    %v72 = vmul.f32 %v70, 1.442695
    %v73 = vpow.pop %v72
    %v74 = vmul.f32 %v71, 1.442695
    %v75 = vpow.pop %v74
    %v76 = vadd.f32 %v73, 1.0
    %v77 = vadd.f32 %v75, 1.0
    %v78 = vrcp.pop %v76
    %v79 = vmul.f32 1.0, %v78
    %v80 = vrcp.pop %v77
    %v81 = vmul.f32 1.0, %v80
    %v82 = vmul.f32 %v29, %v79
    %v83 = vmul.f32 %v30, %v79
    %v84 = vmul.f32 %v31, %v81
    %v85 = vmul.f32 %v32, %v81
    %86 = vst [vmem:[#allocation5] sm:$0xff] %v82
    %87 = vst [vmem:[#allocation5 + $0x8] sm:$0xff] %v83
    %88 = vst [vmem:[#allocation5 + $0x10] sm:$0xff] %v84
    %89 = vst [vmem:[#allocation5 + $0x18] sm:$0xff] %v85
    // Predicated region
    $region18: #{tpu_custom_call.1} parent=1 // pred_check
      _
    $region19: #{tpu_custom_call.1} parent=1 // pred_check_branch
      %91 = sbr.rel (0) target = $region21
    $region20: #{tpu_custom_call.1} parent=1 // pred_region
      %s93 = ssub.s32 512, 512
      %94 = vsyncadd [#allocation4], %s93
      %s95 = sshll.u32 [#allocation5], 4
      %s96 = int_to_ptr.vmem [resolvable:$true] %s95
      %101 = dma.vmem_to_hbm [thread:$0]  %s96, 512, %s3, [#allocation4], 256, 256, 16
    $region21: #{tpu_custom_call.1} parent=1 // pred_fallthru
      _
    // Predicated region
    $region22: #{tpu_custom_call.1} parent=1 // pred_check
      _
    $region23: #{tpu_custom_call.1} parent=1 // pred_check_branch
      %103 = sbr.rel (0) target = $region25
    $region24: #{tpu_custom_call.1} parent=1 // pred_region
      %104 = dma.done [#allocation4], 512
    $region25: #{tpu_custom_call.1} parent=1 // pred_fallthru
      _
    %105 = vsyncpa [#allocation3], 1
    %106 = vsyncpa [#allocation4], 1

</llo_original>
